<compile_context>
chip_gen: v7x
topology: tpu7x:2x2x1
jax: 0.10.0
libtpu: 0.0.40
codegen_flags: <defaults>
</compile_context>

<pallas_src>
import jax
import jax.numpy as jnp
from jax.experimental import pallas as pl
from jax.experimental.pallas import tpu as pltpu


def _round_up(x, m):
    return ((x + m - 1) // m) * m


def _pick_tile(s_pad, max_tile):
    """Largest multiple of 128 that divides s_pad and is <= max_tile (s_pad % 128 == 0)."""
    cap = min(max_tile, s_pad)
    t = (cap // 128) * 128
    while t > 128 and s_pad % t != 0:
        t -= 128
    return max(t, 128)


def locse_fused_kernel(packed_ref, w_ref, o_ref):
    # packed_ref: (8 + d, TS) rows = [cx,cy,cz, nx,ny,nz, dist, ones, f0..f_{d-1}]
    # w_ref:      (C_out, 8)  cols = [s(Wc+Wr) | s(Wn-Wr) | s*Wd | folded bias]
    # o_ref:      (C_out + d, TS)
    p = packed_ref[...]                                                  # (8+d, TS) f32
    y = jnp.dot(w_ref[...], p[:8, :], preferred_element_type=jnp.float32)  # (C_out, TS)
    mlp = jnp.maximum(y, 0.0)                                            # ReLU (BN/bias folded)
    o_ref[...] = jnp.concatenate([mlp, p[8:, :]], axis=0).astype(o_ref.dtype)


def locse_forward(coords, features, knn_idx, knn_dist,
                  weight, bias, bn_gamma, bn_beta, bn_mean, bn_var,
                  *, eps=1e-6, max_tile_s=16384):
    """coords: (B,N,3) f32; features: (B,d,N,1) f32; knn_idx: (B,N,K) i32; knn_dist: (B,N,K) f32.
    weight: (C_out, 10) squeezed 1x1-conv kernel; bias/bn_*: (C_out,).
    Returns (B, C_out + d, N, K) f32."""
    B, N, K = knn_idx.shape
    C_out = weight.shape[0]
    d_feat = features.shape[1]
    S = N * K

    # ---- fold BN (eval, eps=1e-6 as in the module) + relative-position structure into (C_out,8) ----
    s = (bn_gamma / jnp.sqrt(bn_var + eps)).astype(jnp.float32)
    Wc, Wn, Wr, Wd = weight[:, 0:3], weight[:, 3:6], weight[:, 6:9], weight[:, 9:10]
    w_pk = jnp.concatenate(
        [s[:, None] * (Wc + Wr),                       # centers
         s[:, None] * (Wn - Wr),                       # neighbors
         s[:, None] * Wd,                              # knn distance
         (s * (bias - bn_mean) + bn_beta)[:, None]],   # ones row -> folded conv bias + BN shift
        axis=1).astype(jnp.float32)                    # (C_out, 8)

    # ---- pack every lane-resolution input into ONE sublane-aligned channel-first stream ----
    coords_t = jnp.transpose(coords, (0, 2, 1)).astype(jnp.float32)                 # (B,3,N)
    centers = jnp.broadcast_to(coords_t[:, :, :, None], (B, 3, N, K)).reshape(B, 3, S)
    idx_flat = jnp.broadcast_to(knn_idx.reshape(B, 1, S), (B, 3, S))
    neighbors = jnp.take_along_axis(coords_t, idx_flat, axis=2)                      # (B,3,S)
    dist = knn_dist.reshape(B, 1, S).astype(jnp.float32)
    ones = jnp.ones((B, 1, S), jnp.float32)
    feats = jnp.broadcast_to(features.reshape(B, d_feat, N, 1),
                             (B, d_feat, N, K)).reshape(B, d_feat, S).astype(jnp.float32)
    packed = jnp.concatenate([centers, neighbors, dist, ones, feats], axis=1)        # (B, 8+d, S)

    # ---- spatial tiling: lane-dense tiles; S_pad == S whenever S is a multiple of 128 ----
    S_pad = _round_up(max(S, 128), 128)
    tile_s = _pick_tile(S_pad, max_tile_s)
    if S_pad != S:
        packed = jnp.pad(packed, ((0, 0), (0, 0), (0, S_pad - S)))

    C_pack = 8 + d_feat
    C_total = C_out + d_feat
    grid = (B, S_pad // tile_s)

    out = pl.pallas_call(
        locse_fused_kernel,
        out_shape=jax.ShapeDtypeStruct((B, C_total, S_pad), jnp.float32),
        grid_spec=pltpu.PrefetchScalarGridSpec(
            num_scalar_prefetch=0,
            grid=grid,
            in_specs=[
                pl.BlockSpec((None, C_pack, tile_s), lambda b, si: (b, 0, si)),  # packed stream
                pl.BlockSpec((C_out, 8), lambda b, si: (0, 0)),                  # folded weights
            ],
            out_specs=pl.BlockSpec((None, C_total, tile_s), lambda b, si: (b, 0, si)),
        ),
        compiler_params=pltpu.CompilerParams(
            dimension_semantics=("parallel", "parallel")),
    )(packed, w_pk)

    if S_pad != S:
        # Pad lanes are exact zeros (bias rides the ones row, which is zero in the pad region),
        # but they must be dropped to recover the (N, K) spatial layout.
        out = out[:, :, :S]
    return out.reshape(B, C_total, N, K)


def reference_locse(coords, features, knn_idx, knn_dist,
                    weight, bias, bn_gamma, bn_beta, bn_mean, bn_var, eps=1e-6):
    """Pure-JAX port of the PyTorch LocSE.forward (eval-mode BN)."""
    B, N, K = knn_idx.shape
    coords_t = jnp.transpose(coords, (0, 2, 1))                                   # (B,3,N)
    extended_coords = jnp.broadcast_to(coords_t[:, :, :, None], (B, 3, N, K))
    idx = jnp.broadcast_to(knn_idx[:, None, :, :], (B, 3, N, K))
    neighbors = jnp.take_along_axis(extended_coords, idx, axis=2)
    spatial_enc = jnp.concatenate(
        [extended_coords, neighbors, extended_coords - neighbors,
         knn_dist[:, None, :, :]], axis=1)                                        # (B,10,N,K)
    y = jnp.einsum("oc,bcnk->bonk", weight, spatial_enc) + bias[None, :, None, None]
    inv_std = 1.0 / jnp.sqrt(bn_var + eps)
    y = (y - bn_mean[None, :, None, None]) * (bn_gamma * inv_std)[None, :, None, None] \
        + bn_beta[None, :, None, None]
    y = jnp.maximum(y, 0.0)                                                       # ReLU
    d = features.shape[1]
    feats = jnp.broadcast_to(features, (B, d, N, K))
    return jnp.concatenate([y, feats], axis=1)


if __name__ == "__main__":
    key = jax.random.PRNGKey(0)
    keys = jax.random.split(key, 10)

    B, N, K = 2, 128, 16          # batch, points, neighbors  (S = N*K = 2048, multiple of 128)
    d_out = 32                    # SharedMLP output channels
    d_feat = 16                   # incoming feature channels

    coords = jax.random.normal(keys[0], (B, N, 3), dtype=jnp.float32)
    features = jax.random.normal(keys[1], (B, d_feat, N, 1), dtype=jnp.float32)
    knn_idx = jax.random.randint(keys[2], (B, N, K), 0, N, dtype=jnp.int32)
    knn_dist = jnp.abs(jax.random.normal(keys[3], (B, N, K), dtype=jnp.float32))

    # SharedMLP(10, d_out) parameters: 1x1 conv kernel squeezed + BatchNorm2d(d_out, eps=1e-6).
    weight = 0.1 * jax.random.normal(keys[4], (d_out, 10), dtype=jnp.float32)
    bias = 0.05 * jax.random.normal(keys[5], (d_out,), dtype=jnp.float32)
    bn_gamma = 1.0 + 0.1 * jax.random.normal(keys[6], (d_out,), dtype=jnp.float32)
    bn_beta = 0.1 * jax.random.normal(keys[7], (d_out,), dtype=jnp.float32)
    bn_mean = 0.1 * jax.random.normal(keys[8], (d_out,), dtype=jnp.float32)
    bn_var = jnp.abs(jax.random.normal(keys[9], (d_out,), dtype=jnp.float32)) + 0.5

    out = locse_forward(coords, features, knn_idx, knn_dist,
                        weight, bias, bn_gamma, bn_beta, bn_mean, bn_var)
    out = jax.block_until_ready(out)

    ref = reference_locse(coords, features, knn_idx, knn_dist,
                          weight, bias, bn_gamma, bn_beta, bn_mean, bn_var)
    assert out.shape == (B, d_out + d_feat, N, K), out.shape
    assert jnp.allclose(out, ref, atol=1e-4, rtol=1e-4), "mismatch vs reference"

    print("KERNEL_OK")
</pallas_src>

<mosaic_0001>
module attributes {stable_mosaic.version = 11 : i64} {
  func.func @locse_fused_kernel(%arg0: i32, %arg1: i32, %arg2: memref<1x24x2048xf32, #tpu.memory_space<vmem>>, %arg3: memref<32x8xf32, #tpu.memory_space<vmem>>, %arg4: memref<1x48x2048xf32, #tpu.memory_space<vmem>>) attributes {dimension_semantics = [#tpu.dimension_semantics<parallel>, #tpu.dimension_semantics<parallel>], iteration_bounds = array<i64: 2, 1>, scalar_prefetch = 0 : i64, scratch_operands = 0 : i64, tpu.core_type = #tpu.core_type<tc>, window_params = [{transform_indices = @transform_0, window_bounds = array<i64: 1, 24, 2048>}, {pipeline_mode = #tpu.pipeline_mode<synchronous>, transform_indices = @transform_1, window_bounds = array<i64: 32, 8>}, {transform_indices = @transform_2, window_bounds = array<i64: 1, 48, 2048>}]} {
    %c0 = arith.constant 0 : index
    %c0_0 = arith.constant 0 : index
    %c0_1 = arith.constant 0 : index
    %0 = vector.load %arg2[%c0, %c0_0, %c0_1] : memref<1x24x2048xf32, #tpu.memory_space<vmem>>, vector<1x24x2048xf32>
    %1 = vector.shape_cast %0 : vector<1x24x2048xf32> to vector<24x2048xf32>
    %c0_2 = arith.constant 0 : index
    %c0_3 = arith.constant 0 : index
    %2 = vector.load %arg3[%c0_2, %c0_3] : memref<32x8xf32, #tpu.memory_space<vmem>>, vector<32x8xf32>
    %3 = vector.extract_strided_slice %1 {offsets = [0, 0], sizes = [8, 2048], strides = [1, 1]} : vector<24x2048xf32> to vector<8x2048xf32>
    %cst = arith.constant dense<0.000000e+00> : vector<32x2048xf32>
    %4 = tpu.matmul %2, %3, %cst {dimension_numbers = #tpu.dot_dimension_numbers<[1], [0], [0], [1], [0, 0, 1, 1], [], []>} : vector<32x8xf32>, vector<8x2048xf32>, vector<32x2048xf32> -> vector<32x2048xf32>
    %cst_4 = arith.constant 0.000000e+00 : f32
    %5 = vector.broadcast %cst_4 : f32 to vector<32x2048xf32>
    %6 = arith.maximumf %4, %5 : vector<32x2048xf32>
    %7 = vector.extract_strided_slice %1 {offsets = [8, 0], sizes = [16, 2048], strides = [1, 1]} : vector<24x2048xf32> to vector<16x2048xf32>
    %8 = tpu.concatenate %6, %7 in 0 : vector<32x2048xf32>, vector<16x2048xf32> -> vector<48x2048xf32>
    %c0_5 = arith.constant 0 : index
    %c0_6 = arith.constant 0 : index
    %c0_7 = arith.constant 0 : index
    %9 = vector.load %arg4[%c0_5, %c0_6, %c0_7] : memref<1x48x2048xf32, #tpu.memory_space<vmem>>, vector<1x48x2048xf32>
    %10 = vector.shape_cast %9 : vector<1x48x2048xf32> to vector<48x2048xf32>
    %11 = vector.shape_cast %8 : vector<48x2048xf32> to vector<1x48x2048xf32>
    tpu.vector_store %arg4[%c0_5, %c0_6, %c0_7], %11 {strides = array<i32>} : memref<1x48x2048xf32, #tpu.memory_space<vmem>>, vector<1x48x2048xf32>,
    return
  }
  func.func @transform_0(%arg0: i32, %arg1: i32) -> (i32, i32, i32) {
    %c0_i32 = arith.constant 0 : i32
    %c0_i32_0 = arith.constant 0 : i32
    return %arg0, %c0_i32, %arg1 : i32, i32, i32
  }
  func.func @transform_1(%arg0: i32, %arg1: i32) -> (i32, i32) {
    %c0_i32 = arith.constant 0 : i32
    %c0_i32_0 = arith.constant 0 : i32
    %c0_i32_1 = arith.constant 0 : i32
    return %c0_i32, %c0_i32_0 : i32, i32
  }
  func.func @transform_2(%arg0: i32, %arg1: i32) -> (i32, i32, i32) {
    %c0_i32 = arith.constant 0 : i32
    %c0_i32_0 = arith.constant 0 : i32
    return %arg0, %c0_i32, %arg1 : i32, i32, i32
  }
}

</mosaic_0001>

<llo_original>
// kernel: tpu_custom_call.1
$region0: #{tpu_custom_call.1}
  #allocation0 [shape = 'u32[]', space=smem, size = 0x4, offset = 0x4, fixed_abs, tag = 'smem constant byte address 0x4 - core index']
  #allocation1 [shape = 'u32[144,128]{1,0:T(1,128)}', space=vmem, size = 0x12000, scoped, tag = 'internal scratch']
  %s0 = inlined_call_operand.hbm [shape: f32[2,24,2048], index: 0, kind: input, shape index: {}]
  %s1 = inlined_call_operand.vmem [shape: f32[32,8], index: 1, kind: input, shape index: {}]
  %s2 = inlined_call_operand.hbm [shape: f32[2,48,2048], index: 2, kind: output, shape index: {}]
  %s3 = sld [smem:[#allocation0]]
  $region45: #{tpu_custom_call.1} parent=0
    _
  %s5 = ssub.s32 1, %s3
  %s6 = scalar_select 0, %s5, %s3
  $region1: #{tpu_custom_call.1} parent=0
    #allocation2 [shape = 'u8[393216]{0}', space=vmem, size = 0x60000, scoped, tag = 'input window, operand 0']
    #allocation3 [shape = 's32[2]{0}', space=sflag, size = 0x8, scoped, tag = 'scoped memory for tpu_custom_call.1']
    #allocation4 [shape = 's32[2]{0}', space=sflag, size = 0x8, scoped, tag = 'scoped memory for tpu_custom_call.1']
    #allocation5 [shape = 'u8[786432]{0}', space=vmem, size = 0xc0000, scoped, tag = 'output window, operand 0']
    %7 = vsyncpa [#allocation3], 0
    %s8 = scalar_lea.sflag [#allocation3], 1
    %9 = vsyncpa %s8, 0
    %10 = vsyncpa [#allocation4], 0
    %s11 = scalar_lea.sflag [#allocation4], 1
    %12 = vsyncpa %s11, 0
    loop: start=0, step=1, limit=4
    $region2: #{tpu_custom_call.1} parent=1 // loop_pre_header
      _
    $region3: #{tpu_custom_call.1} parent=1 // loop_header
      %s14 = sphi 0, %s18
      %p15 = scmp.ge.s32.totalorder %s14, 4
      %s21 = sphi 0, %s33
      %s22 = sphi 0, %s29
      %s23 = sphi 0, %s21
      %s24 = sphi 0, %s22
      %s25 = sphi 0, %s23
      %s26 = sphi 0, %s24
      %s38 = sphi 0, %s40
      %s41 = sphi 0, %s38
      %s42 = sphi 0, %s41
      %s58 = sphi 0, %s42
      %s62 = sphi 0, %s62
      %s64 = sphi 0, %s62
      %s65 = sphi 0, %s64
      %s79 = sphi 0, %s65
      %s87 = sphi 0, %s89
      %s90 = sphi 0, %s87
      %s91 = sphi 0, %s90
      %s107 = sphi 0, %s91
    $region4: #{tpu_custom_call.1} parent=1 // loop_header_branch
      %17 = sbr.rel (%p15) target = $region8
    $region5: #{tpu_custom_call.1} parent=1 // loop_body
      %s19 = ssub.s32 %s14, 1
      %s20 = ssub.s32 %s14, 2
      %s27 = sadd.s32 1, %s22
      %p28 = scmp.ge.s32.totalorder %s27, 1
      %s29 = scalar_select %p28, 0, %s27
      %s30 = sadd.s32 1, %s21
      %s31 = scalar_select %p28, %s30, %s21
      %p32 = scmp.ge.s32.totalorder %s31, 2
      %s33 = scalar_select %p32, 0, %s31
      %s34 = ssub.s32 %s21, %s33
      %s35 = ssub.s32 %s22, %s29
      %s36 = sor.u32 %s34, %s35
      %p37 = scmp.eq.s32.totalorder %s36, 0
      %s39 = sadd.s32 %s38, 1
      %s40 = scalar_select %p37, %s38, %s39
      %p43 = pneg %p37
      %p44 = scmp.eq.s32.totalorder %s14, 1
      %p45 = por %p43, %p44
      %p46 = scmp.ne.s32.totalorder %s38, %s41
      %p47 = scmp.eq.s32.totalorder %s14, 0
      %p48 = por %p46, %p47
      %p49 = scmp.ne.s32.totalorder %s38, %s41
      %p50 = scmp.eq.s32.totalorder %s19, 1
      %p51 = por %p49, %p50
      %p52 = scmp.ne.s32.totalorder %s41, %s42
      %p53 = scmp.eq.s32.totalorder %s19, 0
      %p54 = por %p52, %p53
      %p55 = scmp.ne.s32.totalorder %s41, %s42
      %p56 = scmp.eq.s32.totalorder %s20, 1
      %p57 = por %p55, %p56
      %p59 = scmp.ne.s32.totalorder %s42, %s58
      %p60 = scmp.eq.s32.totalorder %s20, 0
      %p61 = por %p59, %p60
      %s63 = sadd.s32 %s62, 1
      %p66 = scmp.eq.s32.totalorder %s14, 1
      %p67 = scmp.ne.s32.totalorder %s62, %s64
      %p68 = scmp.eq.s32.totalorder %s14, 0
      %p69 = por %p67, %p68
      %p70 = scmp.ne.s32.totalorder %s62, %s64
      %p71 = scmp.eq.s32.totalorder %s19, 1
      %p72 = por %p70, %p71
      %p73 = scmp.ne.s32.totalorder %s64, %s65
      %p74 = scmp.eq.s32.totalorder %s19, 0
      %p75 = por %p73, %p74
      %p76 = scmp.ne.s32.totalorder %s64, %s65
      %p77 = scmp.eq.s32.totalorder %s20, 1
      %p78 = por %p76, %p77
      %p80 = scmp.ne.s32.totalorder %s65, %s79
      %p81 = scmp.eq.s32.totalorder %s20, 0
      %p82 = por %p80, %p81
      %s83 = ssub.s32 %s21, %s33
      %s84 = ssub.s32 %s22, %s29
      %s85 = sor.u32 %s83, %s84
      %p86 = scmp.eq.s32.totalorder %s85, 0
      %s88 = sadd.s32 %s87, 1
      %s89 = scalar_select %p86, %s87, %s88
      %p92 = pneg %p86
      %p93 = scmp.eq.s32.totalorder %s14, 1
      %p94 = por %p92, %p93
      %p95 = scmp.ne.s32.totalorder %s87, %s90
      %p96 = scmp.eq.s32.totalorder %s14, 0
      %p97 = por %p95, %p96
      %p98 = scmp.ne.s32.totalorder %s87, %s90
      %p99 = scmp.eq.s32.totalorder %s19, 1
      %p100 = por %p98, %p99
      %p101 = scmp.ne.s32.totalorder %s90, %s91
      %p102 = scmp.eq.s32.totalorder %s19, 0
      %p103 = por %p101, %p102
      %p104 = scmp.ne.s32.totalorder %s90, %s91
      %p105 = scmp.eq.s32.totalorder %s20, 1
      %p106 = por %p104, %p105
      %p108 = scmp.ne.s32.totalorder %s91, %s107
      %p109 = scmp.eq.s32.totalorder %s20, 0
      %p110 = por %p108, %p109
      %p111 = scmp.le.s32.totalorder 1, %s14
      %p112 = scmp.lt.s32.totalorder %s14, 3
      %p113 = pnand %p111, %p112
      %p114 = pneg %p113
      // Predicated region
      $region9: #{tpu_custom_call.1} parent=5 // pred_check
        _
      $region10: #{tpu_custom_call.1} parent=5 // pred_check_branch
        %116 = sbr.rel (%p113) target = $region12
      $region11: #{tpu_custom_call.1} parent=5 // pred_region
        %s117 = ssub.s32 %s14, 1
        // Predicated region
        $region13: #{tpu_custom_call.1} parent=11 // pred_check
          %p118 = pneg %p75
        $region14: #{tpu_custom_call.1} parent=11 // pred_check_branch
          %120 = sbr.rel (%p118) target = $region16
        $region15: #{tpu_custom_call.1} parent=11 // pred_region
          _
        $region16: #{tpu_custom_call.1} parent=11 // pred_fallthru
          _
      $region12: #{tpu_custom_call.1} parent=5 // pred_fallthru
        _
      %p121 = scmp.lt.s32.totalorder %s14, 2
      // Predicated region
      $region17: #{tpu_custom_call.1} parent=5 // pred_check
        %p122 = pneg %p121
      $region18: #{tpu_custom_call.1} parent=5 // pred_check_branch
        %124 = sbr.rel (%p122) target = $region20
      $region19: #{tpu_custom_call.1} parent=5 // pred_region
        // Predicated region
        $region21: #{tpu_custom_call.1} parent=19 // pred_check
          %p125 = pneg %p48
        $region22: #{tpu_custom_call.1} parent=19 // pred_check_branch
          %127 = sbr.rel (%p125) target = $region24
        $region23: #{tpu_custom_call.1} parent=19 // pred_region
          %s128 = sand.u32 %s38, 1
          %s129 = scalar_lea.sflag [#allocation3], %s128
          %s130 = sand.u32 %s38, 1
          %s131 = smul.addr %s130, 384
          %s132 = scalar_lea.vmem [#allocation2], %s131
          %s133 = smul.u32 16, %s22
          %s135 = ssub.s32 6144, 6144
          %136 = vsyncadd %s129, %s135
          %s137 = smul.addr %s21, 48
          %s138 = sadd.s32 %s133, %s137
          %s139 = smul.addr %s138, 128
          %s140 = scalar_lea.hbm %s0, %s139
          %s141 = sshll.u32 %s132, 4
          %s142 = int_to_ptr.vmem [resolvable:$true] %s141
          %147 = dma.hbm_to_vmem [thread:$0]  %s140, 6144, %s142, %s129, 2048, 2048, 128
        $region24: #{tpu_custom_call.1} parent=19 // pred_fallthru
          _
      $region20: #{tpu_custom_call.1} parent=5 // pred_fallthru
        _
      %p148 = scmp.le.s32.totalorder 1, %s14
      %p149 = scmp.lt.s32.totalorder %s14, 3
      %p150 = pnand %p148, %p149
      %p151 = pneg %p150
      // Predicated region
      $region25: #{tpu_custom_call.1} parent=5 // pred_check
        _
      $region26: #{tpu_custom_call.1} parent=5 // pred_check_branch
        %153 = sbr.rel (%p150) target = $region28
      $region27: #{tpu_custom_call.1} parent=5 // pred_region
        %s154 = ssub.s32 %s14, 1
        %s155 = sand.u32 %s41, 1
        %s156 = scalar_lea.sflag [#allocation3], %s155
        %s157 = sand.u32 %s41, 1
        %s158 = smul.addr %s157, 384
        %s159 = scalar_lea.vmem [#allocation2], %s158
        // Predicated region
        $region29: #{tpu_custom_call.1} parent=27 // pred_check
          %p160 = pneg %p54
        $region30: #{tpu_custom_call.1} parent=27 // pred_check_branch
          %162 = sbr.rel (%p160) target = $region32
        $region31: #{tpu_custom_call.1} parent=27 // pred_region
          %163 = dma.done %s156, 6144
        $region32: #{tpu_custom_call.1} parent=27 // pred_fallthru
          _
        %s164 = sand.u32 %s41, 1
        %s165 = scalar_lea.sflag [#allocation3], %s164
        %s166 = sand.u32 %s41, 1
        %s167 = smul.addr %s166, 384
        %s168 = scalar_lea.vmem [#allocation2], %s167
        %p169 = pneg %p54
        %p170 = pneg %p51
        %p171 = pneg %p75
        %p172 = pneg %p72
        %p173 = pneg %p103
        %p174 = pneg %p100
        %s175 = sand.u32 %s90, 1
        %s176 = scalar_lea.sflag [#allocation4], %s175
        %s177 = sand.u32 %s90, 1
        %s178 = smul.addr %s177, 768
        %s179 = scalar_lea.vmem [#allocation5], %s178
        %s180 = smul.u32 16, %s24
        %s181 = smul.u32 16, %s24
        %v182 = vld [vmem:[%s159] sm:$0xff]
        %v183 = vld [vmem:[%s159 + $0x8] sm:$0xff]
        %v184 = vld [vmem:[%s159 + $0x10] sm:$0xff]
        %v185 = vld [vmem:[%s159 + $0x18] sm:$0xff]
        %v186 = vld [vmem:[%s159 + $0x20] sm:$0xff]
        %v187 = vld [vmem:[%s159 + $0x28] sm:$0xff]
        %v188 = vld [vmem:[%s159 + $0x30] sm:$0xff]
        %v189 = vld [vmem:[%s159 + $0x38] sm:$0xff]
        %v190 = vld [vmem:[%s159 + $0x40] sm:$0xff]
        %v191 = vld [vmem:[%s159 + $0x48] sm:$0xff]
        %v192 = vld [vmem:[%s159 + $0x50] sm:$0xff]
        %v193 = vld [vmem:[%s159 + $0x58] sm:$0xff]
        %v194 = vld [vmem:[%s159 + $0x60] sm:$0xff]
        %v195 = vld [vmem:[%s159 + $0x68] sm:$0xff]
        %v196 = vld [vmem:[%s159 + $0x70] sm:$0xff]
        %v197 = vld [vmem:[%s159 + $0x78] sm:$0xff]
        %v198 = vld [vmem:[%s159 + $0x80] sm:$0xff]
        %v199 = vld [vmem:[%s159 + $0x88] sm:$0xff]
        %v200 = vld [vmem:[%s159 + $0x90] sm:$0xff]
        %v201 = vld [vmem:[%s159 + $0x98] sm:$0xff]
        %v202 = vld [vmem:[%s159 + $0xa0] sm:$0xff]
        %v203 = vld [vmem:[%s159 + $0xa8] sm:$0xff]
        %v204 = vld [vmem:[%s159 + $0xb0] sm:$0xff]
        %v205 = vld [vmem:[%s159 + $0xb8] sm:$0xff]
        %v206 = vld [vmem:[%s159 + $0xc0] sm:$0xff]
        %v207 = vld [vmem:[%s159 + $0xc8] sm:$0xff]
        %v208 = vld [vmem:[%s159 + $0xd0] sm:$0xff]
        %v209 = vld [vmem:[%s159 + $0xd8] sm:$0xff]
        %v210 = vld [vmem:[%s159 + $0xe0] sm:$0xff]
        %v211 = vld [vmem:[%s159 + $0xe8] sm:$0xff]
        %v212 = vld [vmem:[%s159 + $0xf0] sm:$0xff]
        %v213 = vld [vmem:[%s159 + $0xf8] sm:$0xff]
        %v214 = vld [vmem:[%s159 + $0x100] sm:$0xff]
        %v215 = vld [vmem:[%s159 + $0x108] sm:$0xff]
        %v216 = vld [vmem:[%s159 + $0x110] sm:$0xff]
        %v217 = vld [vmem:[%s159 + $0x118] sm:$0xff]
        %v218 = vld [vmem:[%s159 + $0x120] sm:$0xff]
        %v219 = vld [vmem:[%s159 + $0x128] sm:$0xff]
        %v220 = vld [vmem:[%s159 + $0x130] sm:$0xff]
        %v221 = vld [vmem:[%s159 + $0x138] sm:$0xff]
        %v222 = vld [vmem:[%s159 + $0x140] sm:$0xff]
        %v223 = vld [vmem:[%s159 + $0x148] sm:$0xff]
        %v224 = vld [vmem:[%s159 + $0x150] sm:$0xff]
        %v225 = vld [vmem:[%s159 + $0x158] sm:$0xff]
        %v226 = vld [vmem:[%s159 + $0x160] sm:$0xff]
        %v227 = vld [vmem:[%s159 + $0x168] sm:$0xff]
        %v228 = vld [vmem:[%s159 + $0x170] sm:$0xff]
        %v229 = vld [vmem:[%s159 + $0x178] sm:$0xff]
        %v230 = vld [vmem:[%s1] sm:$0xff]
        %v231 = vld [vmem:[%s1 + $0x8] sm:$0xff]
        %v232 = vld [vmem:[%s1 + $0x10] sm:$0xff]
        %v233 = vld [vmem:[%s1 + $0x18] sm:$0xff]
        %vm234 = vcmask 64512
        %v236 = vsel %vm234, %v230, 0
        %v239 = vsel %vm234, %v231, 0
        %v242 = vsel %vm234, %v232, 0
        %v245 = vsel %vm234, %v233, 0
        %247 = vmatprep.subr.mxu0 %v183
        %248 = vmatpush1.msra.mxu0 %v182
        %249 = vmatprep.subr.mxu0 0.0
        %250 = vmatpush1.msra.mxu0 0.0
        %251 = vmatprep.subr.mxu0 0.0
        %252 = vmatpush1.msra.mxu0 0.0
        %253 = vmatprep.subr.mxu0 0.0
        %254 = vmatpush1.msra.mxu0 0.0
        %255 = vmatprep.subr.mxu0 0.0
        %256 = vmatpush1.msra.mxu0 0.0
        %257 = vmatprep.subr.mxu0 0.0
        %258 = vmatpush1.msra.mxu0 0.0
        %259 = vmatprep.subr.mxu0 0.0
        %260 = vmatpush1.msra.mxu0 0.0
        %261 = vmatprep.subr.mxu0 0.0
        %262 = vmatpush1.msra.mxu0 0.0
        %263 = vmatprep.subr.mxu0 0.0
        %264 = vmatpush1.msra.mxu0 0.0
        %265 = vmatprep.subr.mxu0 0.0
        %266 = vmatpush1.msra.mxu0 0.0
        %267 = vmatprep.subr.mxu0 0.0
        %268 = vmatpush1.msra.mxu0 0.0
        %269 = vmatprep.subr.mxu0 0.0
        %270 = vmatpush1.msra.mxu0 0.0
        %271 = vmatprep.subr.mxu0 0.0
        %272 = vmatpush1.msra.mxu0 0.0
        %273 = vmatprep.subr.mxu0 0.0
        %274 = vmatpush1.msra.mxu0 0.0
        %275 = vmatprep.subr.mxu0 0.0
        %276 = vmatpush1.msra.mxu0 0.0
        %277 = vmatprep.subr.mxu0 0.0
        %278 = vmatpush1.msra.mxu0 0.0
        %279 = vmatprep.subr.mxu0 0.0
        %280 = vmatpush1.msra.mxu0 0.0
        %281 = vmatprep.subr.mxu0 0.0
        %282 = vmatpush1.msra.mxu0 0.0
        %283 = vmatprep.subr.mxu0 0.0
        %284 = vmatpush1.msra.mxu0 0.0
        %285 = vmatprep.subr.mxu0 0.0
        %286 = vmatpush1.msra.mxu0 0.0
        %287 = vmatprep.subr.mxu0 0.0
        %288 = vmatpush1.msra.mxu0 0.0
        %289 = vmatprep.subr.mxu0 0.0
        %290 = vmatpush1.msra.mxu0 0.0
        %291 = vmatprep.subr.mxu0 0.0
        %292 = vmatpush1.msra.mxu0 0.0
        %293 = vmatprep.subr.mxu0 0.0
        %294 = vmatpush1.msra.mxu0 0.0
        %295 = vmatprep.subr.mxu0 0.0
        %296 = vmatpush1.msra.mxu0 0.0
        %297 = vmatprep.subr.mxu0 0.0
        %298 = vmatpush1.msra.mxu0 0.0
        %299 = vmatprep.subr.mxu0 0.0
        %300 = vmatpush1.msra.mxu0 0.0
        %301 = vmatprep.subr.mxu0 0.0
        %302 = vmatpush1.msra.mxu0 0.0
        %303 = vmatprep.subr.mxu0 0.0
        %304 = vmatpush1.msra.mxu0 0.0
        %305 = vmatprep.subr.mxu0 0.0
        %306 = vmatpush1.msra.mxu0 0.0
        %307 = vmatprep.subr.mxu0 0.0
        %308 = vmatpush1.msra.mxu0 0.0
        %309 = vmatprep.subr.mxu0 0.0
        %310 = vmatpush1.msra.mxu0 0.0
        %311 = vmatprep.mubr.f32.mxu0 0.0
        %312 = vmatmul.mubr.f32.gmra.mrb[0].mxu0 %v236
        %v313 = vpop.f32.mrb[0].mxu0
        %v314 = vadd.f32 0.0, %v313
        %v315 = vpop.f32.mrb[0].mxu0
        %v316 = vadd.f32 0.0, %v315
        %317 = vmatprep.mubr.f32.mxu0 0.0
        %318 = vmatmul.mubr.f32.gmra.mrb[0].mxu0 %v239
        %v319 = vpop.f32.mrb[0].mxu0
        %v320 = vadd.f32 0.0, %v319
        %v321 = vpop.f32.mrb[0].mxu0
        %v322 = vadd.f32 0.0, %v321
        %323 = vmatprep.mubr.f32.mxu0 0.0
        %324 = vmatmul.mubr.f32.gmra.mrb[0].mxu0 %v242
        %v325 = vpop.f32.mrb[0].mxu0
        %v326 = vadd.f32 0.0, %v325
        %v327 = vpop.f32.mrb[0].mxu0
        %v328 = vadd.f32 0.0, %v327
        %329 = vmatprep.mubr.f32.mxu0 0.0
        %330 = vmatmul.mubr.f32.gmra.mrb[0].mxu0 %v245
        %v331 = vpop.f32.mrb[0].mxu0
        %v332 = vadd.f32 0.0, %v331
        %v333 = vpop.f32.mrb[0].mxu0
        %v334 = vadd.f32 0.0, %v333
        %335 = vdwg.mxu0
        %336 = vmatprep.subr.mxu0 %v185
        %337 = vmatpush1.msra.mxu0 %v184
        %338 = vmatprep.subr.mxu0 0.0
        %339 = vmatpush1.msra.mxu0 0.0
        %340 = vmatprep.subr.mxu0 0.0
        %341 = vmatpush1.msra.mxu0 0.0
        %342 = vmatprep.subr.mxu0 0.0
        %343 = vmatpush1.msra.mxu0 0.0
        %344 = vmatprep.subr.mxu0 0.0
        %345 = vmatpush1.msra.mxu0 0.0
        %346 = vmatprep.subr.mxu0 0.0
        %347 = vmatpush1.msra.mxu0 0.0
        %348 = vmatprep.subr.mxu0 0.0
        %349 = vmatpush1.msra.mxu0 0.0
        %350 = vmatprep.subr.mxu0 0.0
        %351 = vmatpush1.msra.mxu0 0.0
        %352 = vmatprep.subr.mxu0 0.0
        %353 = vmatpush1.msra.mxu0 0.0
        %354 = vmatprep.subr.mxu0 0.0
        %355 = vmatpush1.msra.mxu0 0.0
        %356 = vmatprep.subr.mxu0 0.0
        %357 = vmatpush1.msra.mxu0 0.0
        %358 = vmatprep.subr.mxu0 0.0
        %359 = vmatpush1.msra.mxu0 0.0
        %360 = vmatprep.subr.mxu0 0.0
        %361 = vmatpush1.msra.mxu0 0.0
        %362 = vmatprep.subr.mxu0 0.0
        %363 = vmatpush1.msra.mxu0 0.0
        %364 = vmatprep.subr.mxu0 0.0
        %365 = vmatpush1.msra.mxu0 0.0
        %366 = vmatprep.subr.mxu0 0.0
        %367 = vmatpush1.msra.mxu0 0.0
        %368 = vmatprep.subr.mxu0 0.0
        %369 = vmatpush1.msra.mxu0 0.0
        %370 = vmatprep.subr.mxu0 0.0
        %371 = vmatpush1.msra.mxu0 0.0
        %372 = vmatprep.subr.mxu0 0.0
        %373 = vmatpush1.msra.mxu0 0.0
        %374 = vmatprep.subr.mxu0 0.0
        %375 = vmatpush1.msra.mxu0 0.0
        %376 = vmatprep.subr.mxu0 0.0
        %377 = vmatpush1.msra.mxu0 0.0
        %378 = vmatprep.subr.mxu0 0.0
        %379 = vmatpush1.msra.mxu0 0.0
        %380 = vmatprep.subr.mxu0 0.0
        %381 = vmatpush1.msra.mxu0 0.0
        %382 = vmatprep.subr.mxu0 0.0
        %383 = vmatpush1.msra.mxu0 0.0
        %384 = vmatprep.subr.mxu0 0.0
        %385 = vmatpush1.msra.mxu0 0.0
        %386 = vmatprep.subr.mxu0 0.0
        %387 = vmatpush1.msra.mxu0 0.0
        %388 = vmatprep.subr.mxu0 0.0
        %389 = vmatpush1.msra.mxu0 0.0
        %390 = vmatprep.subr.mxu0 0.0
        %391 = vmatpush1.msra.mxu0 0.0
        %392 = vmatprep.subr.mxu0 0.0
        %393 = vmatpush1.msra.mxu0 0.0
        %394 = vmatprep.subr.mxu0 0.0
        %395 = vmatpush1.msra.mxu0 0.0
        %396 = vmatprep.subr.mxu0 0.0
        %397 = vmatpush1.msra.mxu0 0.0
        %398 = vmatprep.subr.mxu0 0.0
        %399 = vmatpush1.msra.mxu0 0.0
        %400 = vmatprep.mubr.f32.mxu0 0.0
        %401 = vmatmul.mubr.f32.gmra.mrb[0].mxu0 %v236
        %v402 = vpop.f32.mrb[0].mxu0
        %v403 = vadd.f32 0.0, %v402
        %v404 = vpop.f32.mrb[0].mxu0
        %v405 = vadd.f32 0.0, %v404
        %406 = vmatprep.mubr.f32.mxu0 0.0
        %407 = vmatmul.mubr.f32.gmra.mrb[0].mxu0 %v239
        %v408 = vpop.f32.mrb[0].mxu0
        %v409 = vadd.f32 0.0, %v408
        %v410 = vpop.f32.mrb[0].mxu0
        %v411 = vadd.f32 0.0, %v410
        %412 = vmatprep.mubr.f32.mxu0 0.0
        %413 = vmatmul.mubr.f32.gmra.mrb[0].mxu0 %v242
        %v414 = vpop.f32.mrb[0].mxu0
        %v415 = vadd.f32 0.0, %v414
        %v416 = vpop.f32.mrb[0].mxu0
        %v417 = vadd.f32 0.0, %v416
        %418 = vmatprep.mubr.f32.mxu0 0.0
        %419 = vmatmul.mubr.f32.gmra.mrb[0].mxu0 %v245
        %v420 = vpop.f32.mrb[0].mxu0
        %v421 = vadd.f32 0.0, %v420
        %v422 = vpop.f32.mrb[0].mxu0
        %v423 = vadd.f32 0.0, %v422
        %424 = vdwg.mxu0
        %425 = vmatprep.subr.mxu0 %v187
        %426 = vmatpush1.msra.mxu0 %v186
        %427 = vmatprep.subr.mxu0 0.0
        %428 = vmatpush1.msra.mxu0 0.0
        %429 = vmatprep.subr.mxu0 0.0
        %430 = vmatpush1.msra.mxu0 0.0
        %431 = vmatprep.subr.mxu0 0.0
        %432 = vmatpush1.msra.mxu0 0.0
        %433 = vmatprep.subr.mxu0 0.0
        %434 = vmatpush1.msra.mxu0 0.0
        %435 = vmatprep.subr.mxu0 0.0
        %436 = vmatpush1.msra.mxu0 0.0
        %437 = vmatprep.subr.mxu0 0.0
        %438 = vmatpush1.msra.mxu0 0.0
        %439 = vmatprep.subr.mxu0 0.0
        %440 = vmatpush1.msra.mxu0 0.0
        %441 = vmatprep.subr.mxu0 0.0
        %442 = vmatpush1.msra.mxu0 0.0
        %443 = vmatprep.subr.mxu0 0.0
        %444 = vmatpush1.msra.mxu0 0.0
        %445 = vmatprep.subr.mxu0 0.0
        %446 = vmatpush1.msra.mxu0 0.0
        %447 = vmatprep.subr.mxu0 0.0
        %448 = vmatpush1.msra.mxu0 0.0
        %449 = vmatprep.subr.mxu0 0.0
        %450 = vmatpush1.msra.mxu0 0.0
        %451 = vmatprep.subr.mxu0 0.0
        %452 = vmatpush1.msra.mxu0 0.0
        %453 = vmatprep.subr.mxu0 0.0
        %454 = vmatpush1.msra.mxu0 0.0
        %455 = vmatprep.subr.mxu0 0.0
        %456 = vmatpush1.msra.mxu0 0.0
        %457 = vmatprep.subr.mxu0 0.0
        %458 = vmatpush1.msra.mxu0 0.0
        %459 = vmatprep.subr.mxu0 0.0
        %460 = vmatpush1.msra.mxu0 0.0
        %461 = vmatprep.subr.mxu0 0.0
        %462 = vmatpush1.msra.mxu0 0.0
        %463 = vmatprep.subr.mxu0 0.0
        %464 = vmatpush1.msra.mxu0 0.0
        %465 = vmatprep.subr.mxu0 0.0
        %466 = vmatpush1.msra.mxu0 0.0
        %467 = vmatprep.subr.mxu0 0.0
        %468 = vmatpush1.msra.mxu0 0.0
        %469 = vmatprep.subr.mxu0 0.0
        %470 = vmatpush1.msra.mxu0 0.0
        %471 = vmatprep.subr.mxu0 0.0
        %472 = vmatpush1.msra.mxu0 0.0
        %473 = vmatprep.subr.mxu0 0.0
        %474 = vmatpush1.msra.mxu0 0.0
        %475 = vmatprep.subr.mxu0 0.0
        %476 = vmatpush1.msra.mxu0 0.0
        %477 = vmatprep.subr.mxu0 0.0
        %478 = vmatpush1.msra.mxu0 0.0
        %479 = vmatprep.subr.mxu0 0.0
        %480 = vmatpush1.msra.mxu0 0.0
        %481 = vmatprep.subr.mxu0 0.0
        %482 = vmatpush1.msra.mxu0 0.0
        %483 = vmatprep.subr.mxu0 0.0
        %484 = vmatpush1.msra.mxu0 0.0
        %485 = vmatprep.subr.mxu0 0.0
        %486 = vmatpush1.msra.mxu0 0.0
        %487 = vmatprep.subr.mxu0 0.0
        %488 = vmatpush1.msra.mxu0 0.0
        %489 = vmatprep.mubr.f32.mxu0 0.0
        %490 = vmatmul.mubr.f32.gmra.mrb[0].mxu0 %v236
        %v491 = vpop.f32.mrb[0].mxu0
        %v492 = vadd.f32 0.0, %v491
        %v493 = vpop.f32.mrb[0].mxu0
        %v494 = vadd.f32 0.0, %v493
        %495 = vmatprep.mubr.f32.mxu0 0.0
        %496 = vmatmul.mubr.f32.gmra.mrb[0].mxu0 %v239
        %v497 = vpop.f32.mrb[0].mxu0
        %v498 = vadd.f32 0.0, %v497
        %v499 = vpop.f32.mrb[0].mxu0
        %v500 = vadd.f32 0.0, %v499
        %501 = vmatprep.mubr.f32.mxu0 0.0
        %502 = vmatmul.mubr.f32.gmra.mrb[0].mxu0 %v242
        %v503 = vpop.f32.mrb[0].mxu0
        %v504 = vadd.f32 0.0, %v503
        %v505 = vpop.f32.mrb[0].mxu0
        %v506 = vadd.f32 0.0, %v505
        %507 = vmatprep.mubr.f32.mxu0 0.0
        %508 = vmatmul.mubr.f32.gmra.mrb[0].mxu0 %v245
        %v509 = vpop.f32.mrb[0].mxu0
        %v510 = vadd.f32 0.0, %v509
        %v511 = vpop.f32.mrb[0].mxu0
        %v512 = vadd.f32 0.0, %v511
        %513 = vdwg.mxu0
        %514 = vmatprep.subr.mxu0 %v189
        %515 = vmatpush1.msra.mxu0 %v188
        %516 = vmatprep.subr.mxu0 0.0
        %517 = vmatpush1.msra.mxu0 0.0
        %518 = vmatprep.subr.mxu0 0.0
        %519 = vmatpush1.msra.mxu0 0.0
        %520 = vmatprep.subr.mxu0 0.0
        %521 = vmatpush1.msra.mxu0 0.0
        %522 = vmatprep.subr.mxu0 0.0
        %523 = vmatpush1.msra.mxu0 0.0
        %524 = vmatprep.subr.mxu0 0.0
        %525 = vmatpush1.msra.mxu0 0.0
        %526 = vmatprep.subr.mxu0 0.0
        %527 = vmatpush1.msra.mxu0 0.0
        %528 = vmatprep.subr.mxu0 0.0
        %529 = vmatpush1.msra.mxu0 0.0
        %530 = vmatprep.subr.mxu0 0.0
        %531 = vmatpush1.msra.mxu0 0.0
        %532 = vmatprep.subr.mxu0 0.0
        %533 = vmatpush1.msra.mxu0 0.0
        %534 = vmatprep.subr.mxu0 0.0
        %535 = vmatpush1.msra.mxu0 0.0
        %536 = vmatprep.subr.mxu0 0.0
        %537 = vmatpush1.msra.mxu0 0.0
        %538 = vmatprep.subr.mxu0 0.0
        %539 = vmatpush1.msra.mxu0 0.0
        %540 = vmatprep.subr.mxu0 0.0
        %541 = vmatpush1.msra.mxu0 0.0
        %542 = vmatprep.subr.mxu0 0.0
        %543 = vmatpush1.msra.mxu0 0.0
        %544 = vmatprep.subr.mxu0 0.0
        %545 = vmatpush1.msra.mxu0 0.0
        %546 = vmatprep.subr.mxu0 0.0
        %547 = vmatpush1.msra.mxu0 0.0
        %548 = vmatprep.subr.mxu0 0.0
        %549 = vmatpush1.msra.mxu0 0.0
        %550 = vmatprep.subr.mxu0 0.0
        %551 = vmatpush1.msra.mxu0 0.0
        %552 = vmatprep.subr.mxu0 0.0
        %553 = vmatpush1.msra.mxu0 0.0
        %554 = vmatprep.subr.mxu0 0.0
        %555 = vmatpush1.msra.mxu0 0.0
        %556 = vmatprep.subr.mxu0 0.0
        %557 = vmatpush1.msra.mxu0 0.0
        %558 = vmatprep.subr.mxu0 0.0
        %559 = vmatpush1.msra.mxu0 0.0
        %560 = vmatprep.subr.mxu0 0.0
        %561 = vmatpush1.msra.mxu0 0.0
        %562 = vmatprep.subr.mxu0 0.0
        %563 = vmatpush1.msra.mxu0 0.0
        %564 = vmatprep.subr.mxu0 0.0
        %565 = vmatpush1.msra.mxu0 0.0
        %566 = vmatprep.subr.mxu0 0.0
        %567 = vmatpush1.msra.mxu0 0.0
        %568 = vmatprep.subr.mxu0 0.0
        %569 = vmatpush1.msra.mxu0 0.0
        %570 = vmatprep.subr.mxu0 0.0
        %571 = vmatpush1.msra.mxu0 0.0
        %572 = vmatprep.subr.mxu0 0.0
        %573 = vmatpush1.msra.mxu0 0.0
        %574 = vmatprep.subr.mxu0 0.0
        %575 = vmatpush1.msra.mxu0 0.0
        %576 = vmatprep.subr.mxu0 0.0
        %577 = vmatpush1.msra.mxu0 0.0
        %578 = vmatprep.mubr.f32.mxu0 0.0
        %579 = vmatmul.mubr.f32.gmra.mrb[0].mxu0 %v236
        %v580 = vpop.f32.mrb[0].mxu0
        %v581 = vadd.f32 0.0, %v580
        %v582 = vpop.f32.mrb[0].mxu0
        %v583 = vadd.f32 0.0, %v582
        %584 = vmatprep.mubr.f32.mxu0 0.0
        %585 = vmatmul.mubr.f32.gmra.mrb[0].mxu0 %v239
        %v586 = vpop.f32.mrb[0].mxu0
        %v587 = vadd.f32 0.0, %v586
        %v588 = vpop.f32.mrb[0].mxu0
        %v589 = vadd.f32 0.0, %v588
        %590 = vmatprep.mubr.f32.mxu0 0.0
        %591 = vmatmul.mubr.f32.gmra.mrb[0].mxu0 %v242
        %v592 = vpop.f32.mrb[0].mxu0
        %v593 = vadd.f32 0.0, %v592
        %v594 = vpop.f32.mrb[0].mxu0
        %v595 = vadd.f32 0.0, %v594
        %596 = vmatprep.mubr.f32.mxu0 0.0
        %597 = vmatmul.mubr.f32.gmra.mrb[0].mxu0 %v245
        %v598 = vpop.f32.mrb[0].mxu0
        %v599 = vadd.f32 0.0, %v598
        %v600 = vpop.f32.mrb[0].mxu0
        %v601 = vadd.f32 0.0, %v600
        %602 = vdwg.mxu0
        %603 = vmatprep.subr.mxu0 %v191
        %604 = vmatpush1.msra.mxu0 %v190
        %605 = vmatprep.subr.mxu0 0.0
        %606 = vmatpush1.msra.mxu0 0.0
        %607 = vmatprep.subr.mxu0 0.0
        %608 = vmatpush1.msra.mxu0 0.0
        %609 = vmatprep.subr.mxu0 0.0
        %610 = vmatpush1.msra.mxu0 0.0
        %611 = vmatprep.subr.mxu0 0.0
        %612 = vmatpush1.msra.mxu0 0.0
        %613 = vmatprep.subr.mxu0 0.0
        %614 = vmatpush1.msra.mxu0 0.0
        %615 = vmatprep.subr.mxu0 0.0
        %616 = vmatpush1.msra.mxu0 0.0
        %617 = vmatprep.subr.mxu0 0.0
        %618 = vmatpush1.msra.mxu0 0.0
        %619 = vmatprep.subr.mxu0 0.0
        %620 = vmatpush1.msra.mxu0 0.0
        %621 = vmatprep.subr.mxu0 0.0
        %622 = vmatpush1.msra.mxu0 0.0
        %623 = vmatprep.subr.mxu0 0.0
        %624 = vmatpush1.msra.mxu0 0.0
        %625 = vmatprep.subr.mxu0 0.0
        %626 = vmatpush1.msra.mxu0 0.0
        %627 = vmatprep.subr.mxu0 0.0
        %628 = vmatpush1.msra.mxu0 0.0
        %629 = vmatprep.subr.mxu0 0.0
        %630 = vmatpush1.msra.mxu0 0.0
        %631 = vmatprep.subr.mxu0 0.0
        %632 = vmatpush1.msra.mxu0 0.0
        %633 = vmatprep.subr.mxu0 0.0
        %634 = vmatpush1.msra.mxu0 0.0
        %635 = vmatprep.subr.mxu0 0.0
        %636 = vmatpush1.msra.mxu0 0.0
        %637 = vmatprep.subr.mxu0 0.0
        %638 = vmatpush1.msra.mxu0 0.0
        %639 = vmatprep.subr.mxu0 0.0
        %640 = vmatpush1.msra.mxu0 0.0
        %641 = vmatprep.subr.mxu0 0.0
        %642 = vmatpush1.msra.mxu0 0.0
        %643 = vmatprep.subr.mxu0 0.0
        %644 = vmatpush1.msra.mxu0 0.0
        %645 = vmatprep.subr.mxu0 0.0
        %646 = vmatpush1.msra.mxu0 0.0
        %647 = vmatprep.subr.mxu0 0.0
        %648 = vmatpush1.msra.mxu0 0.0
        %649 = vmatprep.subr.mxu0 0.0
        %650 = vmatpush1.msra.mxu0 0.0
        %651 = vmatprep.subr.mxu0 0.0
        %652 = vmatpush1.msra.mxu0 0.0
        %653 = vmatprep.subr.mxu0 0.0
        %654 = vmatpush1.msra.mxu0 0.0
        %655 = vmatprep.subr.mxu0 0.0
        %656 = vmatpush1.msra.mxu0 0.0
        %657 = vmatprep.subr.mxu0 0.0
        %658 = vmatpush1.msra.mxu0 0.0
        %659 = vmatprep.subr.mxu0 0.0
        %660 = vmatpush1.msra.mxu0 0.0
        %661 = vmatprep.subr.mxu0 0.0
        %662 = vmatpush1.msra.mxu0 0.0
        %663 = vmatprep.subr.mxu0 0.0
        %664 = vmatpush1.msra.mxu0 0.0
        %665 = vmatprep.subr.mxu0 0.0
        %666 = vmatpush1.msra.mxu0 0.0
        %667 = vmatprep.mubr.f32.mxu0 0.0
        %668 = vmatmul.mubr.f32.gmra.mrb[0].mxu0 %v236
        %v669 = vpop.f32.mrb[0].mxu0
        %v670 = vadd.f32 0.0, %v669
        %v671 = vpop.f32.mrb[0].mxu0
        %v672 = vadd.f32 0.0, %v671
        %673 = vmatprep.mubr.f32.mxu0 0.0
        %674 = vmatmul.mubr.f32.gmra.mrb[0].mxu0 %v239
        %v675 = vpop.f32.mrb[0].mxu0
        %v676 = vadd.f32 0.0, %v675
        %v677 = vpop.f32.mrb[0].mxu0
        %v678 = vadd.f32 0.0, %v677
        %679 = vmatprep.mubr.f32.mxu0 0.0
        %680 = vmatmul.mubr.f32.gmra.mrb[0].mxu0 %v242
        %v681 = vpop.f32.mrb[0].mxu0
        %v682 = vadd.f32 0.0, %v681
        %v683 = vpop.f32.mrb[0].mxu0
        %v684 = vadd.f32 0.0, %v683
        %685 = vmatprep.mubr.f32.mxu0 0.0
        %686 = vmatmul.mubr.f32.gmra.mrb[0].mxu0 %v245
        %v687 = vpop.f32.mrb[0].mxu0
        %v688 = vadd.f32 0.0, %v687
        %v689 = vpop.f32.mrb[0].mxu0
        %v690 = vadd.f32 0.0, %v689
        %691 = vdwg.mxu0
        %692 = vmatprep.subr.mxu0 %v193
        %693 = vmatpush1.msra.mxu0 %v192
        %694 = vmatprep.subr.mxu0 0.0
        %695 = vmatpush1.msra.mxu0 0.0
        %696 = vmatprep.subr.mxu0 0.0
        %697 = vmatpush1.msra.mxu0 0.0
        %698 = vmatprep.subr.mxu0 0.0
        %699 = vmatpush1.msra.mxu0 0.0
        %700 = vmatprep.subr.mxu0 0.0
        %701 = vmatpush1.msra.mxu0 0.0
        %702 = vmatprep.subr.mxu0 0.0
        %703 = vmatpush1.msra.mxu0 0.0
        %704 = vmatprep.subr.mxu0 0.0
        %705 = vmatpush1.msra.mxu0 0.0
        %706 = vmatprep.subr.mxu0 0.0
        %707 = vmatpush1.msra.mxu0 0.0
        %708 = vmatprep.subr.mxu0 0.0
        %709 = vmatpush1.msra.mxu0 0.0
        %710 = vmatprep.subr.mxu0 0.0
        %711 = vmatpush1.msra.mxu0 0.0
        %712 = vmatprep.subr.mxu0 0.0
        %713 = vmatpush1.msra.mxu0 0.0
        %714 = vmatprep.subr.mxu0 0.0
        %715 = vmatpush1.msra.mxu0 0.0
        %716 = vmatprep.subr.mxu0 0.0
        %717 = vmatpush1.msra.mxu0 0.0
        %718 = vmatprep.subr.mxu0 0.0
        %719 = vmatpush1.msra.mxu0 0.0
        %720 = vmatprep.subr.mxu0 0.0
        %721 = vmatpush1.msra.mxu0 0.0
        %722 = vmatprep.subr.mxu0 0.0
        %723 = vmatpush1.msra.mxu0 0.0
        %724 = vmatprep.subr.mxu0 0.0
        %725 = vmatpush1.msra.mxu0 0.0
        %726 = vmatprep.subr.mxu0 0.0
        %727 = vmatpush1.msra.mxu0 0.0
        %728 = vmatprep.subr.mxu0 0.0
        %729 = vmatpush1.msra.mxu0 0.0
        %730 = vmatprep.subr.mxu0 0.0
        %731 = vmatpush1.msra.mxu0 0.0
        %732 = vmatprep.subr.mxu0 0.0
        %733 = vmatpush1.msra.mxu0 0.0
        %734 = vmatprep.subr.mxu0 0.0
        %735 = vmatpush1.msra.mxu0 0.0
        %736 = vmatprep.subr.mxu0 0.0
        %737 = vmatpush1.msra.mxu0 0.0
        %738 = vmatprep.subr.mxu0 0.0
        %739 = vmatpush1.msra.mxu0 0.0
        %740 = vmatprep.subr.mxu0 0.0
        %741 = vmatpush1.msra.mxu0 0.0
        %742 = vmatprep.subr.mxu0 0.0
        %743 = vmatpush1.msra.mxu0 0.0
        %744 = vmatprep.subr.mxu0 0.0
        %745 = vmatpush1.msra.mxu0 0.0
        %746 = vmatprep.subr.mxu0 0.0
        %747 = vmatpush1.msra.mxu0 0.0
        %748 = vmatprep.subr.mxu0 0.0
        %749 = vmatpush1.msra.mxu0 0.0
        %750 = vmatprep.subr.mxu0 0.0
        %751 = vmatpush1.msra.mxu0 0.0
        %752 = vmatprep.subr.mxu0 0.0
        %753 = vmatpush1.msra.mxu0 0.0
        %754 = vmatprep.subr.mxu0 0.0
        %755 = vmatpush1.msra.mxu0 0.0
        %756 = vmatprep.mubr.f32.mxu0 0.0
        %757 = vmatmul.mubr.f32.gmra.mrb[0].mxu0 %v236
        %v758 = vpop.f32.mrb[0].mxu0
        %v759 = vadd.f32 0.0, %v758
        %v760 = vpop.f32.mrb[0].mxu0
        %v761 = vadd.f32 0.0, %v760
        %762 = vmatprep.mubr.f32.mxu0 0.0
        %763 = vmatmul.mubr.f32.gmra.mrb[0].mxu0 %v239
        %v764 = vpop.f32.mrb[0].mxu0
        %v765 = vadd.f32 0.0, %v764
        %v766 = vpop.f32.mrb[0].mxu0
        %v767 = vadd.f32 0.0, %v766
        %768 = vmatprep.mubr.f32.mxu0 0.0
        %769 = vmatmul.mubr.f32.gmra.mrb[0].mxu0 %v242
        %v770 = vpop.f32.mrb[0].mxu0
        %v771 = vadd.f32 0.0, %v770
        %v772 = vpop.f32.mrb[0].mxu0
        %v773 = vadd.f32 0.0, %v772
        %774 = vmatprep.mubr.f32.mxu0 0.0
        %775 = vmatmul.mubr.f32.gmra.mrb[0].mxu0 %v245
        %v776 = vpop.f32.mrb[0].mxu0
        %v777 = vadd.f32 0.0, %v776
        %v778 = vpop.f32.mrb[0].mxu0
        %v779 = vadd.f32 0.0, %v778
        %780 = vdwg.mxu0
        %781 = vmatprep.subr.mxu0 %v195
        %782 = vmatpush1.msra.mxu0 %v194
        %783 = vmatprep.subr.mxu0 0.0
        %784 = vmatpush1.msra.mxu0 0.0
        %785 = vmatprep.subr.mxu0 0.0
        %786 = vmatpush1.msra.mxu0 0.0
        %787 = vmatprep.subr.mxu0 0.0
        %788 = vmatpush1.msra.mxu0 0.0
        %789 = vmatprep.subr.mxu0 0.0
        %790 = vmatpush1.msra.mxu0 0.0
        %791 = vmatprep.subr.mxu0 0.0
        %792 = vmatpush1.msra.mxu0 0.0
        %793 = vmatprep.subr.mxu0 0.0
        %794 = vmatpush1.msra.mxu0 0.0
        %795 = vmatprep.subr.mxu0 0.0
        %796 = vmatpush1.msra.mxu0 0.0
        %797 = vmatprep.subr.mxu0 0.0
        %798 = vmatpush1.msra.mxu0 0.0
        %799 = vmatprep.subr.mxu0 0.0
        %800 = vmatpush1.msra.mxu0 0.0
        %801 = vmatprep.subr.mxu0 0.0
        %802 = vmatpush1.msra.mxu0 0.0
        %803 = vmatprep.subr.mxu0 0.0
        %804 = vmatpush1.msra.mxu0 0.0
        %805 = vmatprep.subr.mxu0 0.0
        %806 = vmatpush1.msra.mxu0 0.0
        %807 = vmatprep.subr.mxu0 0.0
        %808 = vmatpush1.msra.mxu0 0.0
        %809 = vmatprep.subr.mxu0 0.0
        %810 = vmatpush1.msra.mxu0 0.0
        %811 = vmatprep.subr.mxu0 0.0
        %812 = vmatpush1.msra.mxu0 0.0
        %813 = vmatprep.subr.mxu0 0.0
        %814 = vmatpush1.msra.mxu0 0.0
        %815 = vmatprep.subr.mxu0 0.0
        %816 = vmatpush1.msra.mxu0 0.0
        %817 = vmatprep.subr.mxu0 0.0
        %818 = vmatpush1.msra.mxu0 0.0
        %819 = vmatprep.subr.mxu0 0.0
        %820 = vmatpush1.msra.mxu0 0.0
        %821 = vmatprep.subr.mxu0 0.0
        %822 = vmatpush1.msra.mxu0 0.0
        %823 = vmatprep.subr.mxu0 0.0
        %824 = vmatpush1.msra.mxu0 0.0
        %825 = vmatprep.subr.mxu0 0.0
        %826 = vmatpush1.msra.mxu0 0.0
        %827 = vmatprep.subr.mxu0 0.0
        %828 = vmatpush1.msra.mxu0 0.0
        %829 = vmatprep.subr.mxu0 0.0
        %830 = vmatpush1.msra.mxu0 0.0
        %831 = vmatprep.subr.mxu0 0.0
        %832 = vmatpush1.msra.mxu0 0.0
        %833 = vmatprep.subr.mxu0 0.0
        %834 = vmatpush1.msra.mxu0 0.0
        %835 = vmatprep.subr.mxu0 0.0
        %836 = vmatpush1.msra.mxu0 0.0
        %837 = vmatprep.subr.mxu0 0.0
        %838 = vmatpush1.msra.mxu0 0.0
        %839 = vmatprep.subr.mxu0 0.0
        %840 = vmatpush1.msra.mxu0 0.0
        %841 = vmatprep.subr.mxu0 0.0
        %842 = vmatpush1.msra.mxu0 0.0
        %843 = vmatprep.subr.mxu0 0.0
        %844 = vmatpush1.msra.mxu0 0.0
        %845 = vmatprep.mubr.f32.mxu0 0.0
        %846 = vmatmul.mubr.f32.gmra.mrb[0].mxu0 %v236
        %v847 = vpop.f32.mrb[0].mxu0
        %v848 = vadd.f32 0.0, %v847
        %v849 = vpop.f32.mrb[0].mxu0
        %v850 = vadd.f32 0.0, %v849
        %851 = vmatprep.mubr.f32.mxu0 0.0
        %852 = vmatmul.mubr.f32.gmra.mrb[0].mxu0 %v239
        %v853 = vpop.f32.mrb[0].mxu0
        %v854 = vadd.f32 0.0, %v853
        %v855 = vpop.f32.mrb[0].mxu0
        %v856 = vadd.f32 0.0, %v855
        %857 = vmatprep.mubr.f32.mxu0 0.0
        %858 = vmatmul.mubr.f32.gmra.mrb[0].mxu0 %v242
        %v859 = vpop.f32.mrb[0].mxu0
        %v860 = vadd.f32 0.0, %v859
        %v861 = vpop.f32.mrb[0].mxu0
        %v862 = vadd.f32 0.0, %v861
        %863 = vmatprep.mubr.f32.mxu0 0.0
        %864 = vmatmul.mubr.f32.gmra.mrb[0].mxu0 %v245
        %v865 = vpop.f32.mrb[0].mxu0
        %v866 = vadd.f32 0.0, %v865
        %v867 = vpop.f32.mrb[0].mxu0
        %v868 = vadd.f32 0.0, %v867
        %869 = vdwg.mxu0
        %870 = vmatprep.subr.mxu0 %v197
        %871 = vmatpush1.msra.mxu0 %v196
        %872 = vmatprep.subr.mxu0 0.0
        %873 = vmatpush1.msra.mxu0 0.0
        %874 = vmatprep.subr.mxu0 0.0
        %875 = vmatpush1.msra.mxu0 0.0
        %876 = vmatprep.subr.mxu0 0.0
        %877 = vmatpush1.msra.mxu0 0.0
        %878 = vmatprep.subr.mxu0 0.0
        %879 = vmatpush1.msra.mxu0 0.0
        %880 = vmatprep.subr.mxu0 0.0
        %881 = vmatpush1.msra.mxu0 0.0
        %882 = vmatprep.subr.mxu0 0.0
        %883 = vmatpush1.msra.mxu0 0.0
        %884 = vmatprep.subr.mxu0 0.0
        %885 = vmatpush1.msra.mxu0 0.0
        %886 = vmatprep.subr.mxu0 0.0
        %887 = vmatpush1.msra.mxu0 0.0
        %888 = vmatprep.subr.mxu0 0.0
        %889 = vmatpush1.msra.mxu0 0.0
        %890 = vmatprep.subr.mxu0 0.0
        %891 = vmatpush1.msra.mxu0 0.0
        %892 = vmatprep.subr.mxu0 0.0
        %893 = vmatpush1.msra.mxu0 0.0
        %894 = vmatprep.subr.mxu0 0.0
        %895 = vmatpush1.msra.mxu0 0.0
        %896 = vmatprep.subr.mxu0 0.0
        %897 = vmatpush1.msra.mxu0 0.0
        %898 = vmatprep.subr.mxu0 0.0
        %899 = vmatpush1.msra.mxu0 0.0
        %900 = vmatprep.subr.mxu0 0.0
        %901 = vmatpush1.msra.mxu0 0.0
        %902 = vmatprep.subr.mxu0 0.0
        %903 = vmatpush1.msra.mxu0 0.0
        %904 = vmatprep.subr.mxu0 0.0
        %905 = vmatpush1.msra.mxu0 0.0
        %906 = vmatprep.subr.mxu0 0.0
        %907 = vmatpush1.msra.mxu0 0.0
        %908 = vmatprep.subr.mxu0 0.0
        %909 = vmatpush1.msra.mxu0 0.0
        %910 = vmatprep.subr.mxu0 0.0
        %911 = vmatpush1.msra.mxu0 0.0
        %912 = vmatprep.subr.mxu0 0.0
        %913 = vmatpush1.msra.mxu0 0.0
        %914 = vmatprep.subr.mxu0 0.0
        %915 = vmatpush1.msra.mxu0 0.0
        %916 = vmatprep.subr.mxu0 0.0
        %917 = vmatpush1.msra.mxu0 0.0
        %918 = vmatprep.subr.mxu0 0.0
        %919 = vmatpush1.msra.mxu0 0.0
        %920 = vmatprep.subr.mxu0 0.0
        %921 = vmatpush1.msra.mxu0 0.0
        %922 = vmatprep.subr.mxu0 0.0
        %923 = vmatpush1.msra.mxu0 0.0
        %924 = vmatprep.subr.mxu0 0.0
        %925 = vmatpush1.msra.mxu0 0.0
        %926 = vmatprep.subr.mxu0 0.0
        %927 = vmatpush1.msra.mxu0 0.0
        %928 = vmatprep.subr.mxu0 0.0
        %929 = vmatpush1.msra.mxu0 0.0
        %930 = vmatprep.subr.mxu0 0.0
        %931 = vmatpush1.msra.mxu0 0.0
        %932 = vmatprep.subr.mxu0 0.0
        %933 = vmatpush1.msra.mxu0 0.0
        %934 = vmatprep.mubr.f32.mxu0 0.0
        %935 = vmatmul.mubr.f32.gmra.mrb[0].mxu0 %v236
        %v936 = vpop.f32.mrb[0].mxu0
        %v937 = vadd.f32 0.0, %v936
        %v938 = vpop.f32.mrb[0].mxu0
        %v939 = vadd.f32 0.0, %v938
        %940 = vmatprep.mubr.f32.mxu0 0.0
        %941 = vmatmul.mubr.f32.gmra.mrb[0].mxu0 %v239
        %v942 = vpop.f32.mrb[0].mxu0
        %v943 = vadd.f32 0.0, %v942
        %v944 = vpop.f32.mrb[0].mxu0
        %v945 = vadd.f32 0.0, %v944
        %946 = vmatprep.mubr.f32.mxu0 0.0
        %947 = vmatmul.mubr.f32.gmra.mrb[0].mxu0 %v242
        %v948 = vpop.f32.mrb[0].mxu0
        %v949 = vadd.f32 0.0, %v948
        %v950 = vpop.f32.mrb[0].mxu0
        %v951 = vadd.f32 0.0, %v950
        %952 = vmatprep.mubr.f32.mxu0 0.0
        %953 = vmatmul.mubr.f32.gmra.mrb[0].mxu0 %v245
        %v954 = vpop.f32.mrb[0].mxu0
        %v955 = vadd.f32 0.0, %v954
        %v956 = vpop.f32.mrb[0].mxu0
        %v957 = vadd.f32 0.0, %v956
        %958 = vdwg.mxu0
        %v959 = vmax.f32 %v314, 0.0
        %v960 = vmax.f32 %v316, 0.0
        %v961 = vmax.f32 %v403, 0.0
        %v962 = vmax.f32 %v405, 0.0
        %v963 = vmax.f32 %v492, 0.0
        %v964 = vmax.f32 %v494, 0.0
        %v965 = vmax.f32 %v581, 0.0
        %v966 = vmax.f32 %v583, 0.0
        %v967 = vmax.f32 %v670, 0.0
        %v968 = vmax.f32 %v672, 0.0
        %v969 = vmax.f32 %v759, 0.0
        %v970 = vmax.f32 %v761, 0.0
        %v971 = vmax.f32 %v848, 0.0
        %v972 = vmax.f32 %v850, 0.0
        %v973 = vmax.f32 %v937, 0.0
        %v974 = vmax.f32 %v939, 0.0
        %v975 = vmax.f32 %v320, 0.0
        %v976 = vmax.f32 %v322, 0.0
        %v977 = vmax.f32 %v409, 0.0
        %v978 = vmax.f32 %v411, 0.0
        %v979 = vmax.f32 %v498, 0.0
        %v980 = vmax.f32 %v500, 0.0
        %v981 = vmax.f32 %v587, 0.0
        %v982 = vmax.f32 %v589, 0.0
        %v983 = vmax.f32 %v676, 0.0
        %v984 = vmax.f32 %v678, 0.0
        %v985 = vmax.f32 %v765, 0.0
        %v986 = vmax.f32 %v767, 0.0
        %v987 = vmax.f32 %v854, 0.0
        %v988 = vmax.f32 %v856, 0.0
        %v989 = vmax.f32 %v943, 0.0
        %v990 = vmax.f32 %v945, 0.0
        %v991 = vmax.f32 %v326, 0.0
        %v992 = vmax.f32 %v328, 0.0
        %v993 = vmax.f32 %v415, 0.0
        %v994 = vmax.f32 %v417, 0.0
        %v995 = vmax.f32 %v504, 0.0
        %v996 = vmax.f32 %v506, 0.0
        %v997 = vmax.f32 %v593, 0.0
        %v998 = vmax.f32 %v595, 0.0
        %v999 = vmax.f32 %v682, 0.0
        %v1000 = vmax.f32 %v684, 0.0
        %v1001 = vmax.f32 %v771, 0.0
        %v1002 = vmax.f32 %v773, 0.0
        %v1003 = vmax.f32 %v860, 0.0
        %v1004 = vmax.f32 %v862, 0.0
        %v1005 = vmax.f32 %v949, 0.0
        %v1006 = vmax.f32 %v951, 0.0
        %v1007 = vmax.f32 %v332, 0.0
        %v1008 = vmax.f32 %v334, 0.0
        %v1009 = vmax.f32 %v421, 0.0
        %v1010 = vmax.f32 %v423, 0.0
        %v1011 = vmax.f32 %v510, 0.0
        %v1012 = vmax.f32 %v512, 0.0
        %v1013 = vmax.f32 %v599, 0.0
        %v1014 = vmax.f32 %v601, 0.0
        %v1015 = vmax.f32 %v688, 0.0
        %v1016 = vmax.f32 %v690, 0.0
        %v1017 = vmax.f32 %v777, 0.0
        %v1018 = vmax.f32 %v779, 0.0
        %v1019 = vmax.f32 %v866, 0.0
        %v1020 = vmax.f32 %v868, 0.0
        %v1021 = vmax.f32 %v955, 0.0
        %v1022 = vmax.f32 %v957, 0.0
        %1023 = vst [vmem:[%s179] sm:$0xff] %v959
        %1024 = vst [vmem:[%s179 + $0x8] sm:$0xff] %v960
        %1025 = vst [vmem:[%s179 + $0x10] sm:$0xff] %v961
        %1026 = vst [vmem:[%s179 + $0x18] sm:$0xff] %v962
        %1027 = vst [vmem:[%s179 + $0x20] sm:$0xff] %v963
        %1028 = vst [vmem:[%s179 + $0x28] sm:$0xff] %v964
        %1029 = vst [vmem:[%s179 + $0x30] sm:$0xff] %v965
        %1030 = vst [vmem:[%s179 + $0x38] sm:$0xff] %v966
        %1031 = vst [vmem:[%s179 + $0x40] sm:$0xff] %v967
        %1032 = vst [vmem:[%s179 + $0x48] sm:$0xff] %v968
        %1033 = vst [vmem:[%s179 + $0x50] sm:$0xff] %v969
        %1034 = vst [vmem:[%s179 + $0x58] sm:$0xff] %v970
        %1035 = vst [vmem:[%s179 + $0x60] sm:$0xff] %v971
        %1036 = vst [vmem:[%s179 + $0x68] sm:$0xff] %v972
        %1037 = vst [vmem:[%s179 + $0x70] sm:$0xff] %v973
        %1038 = vst [vmem:[%s179 + $0x78] sm:$0xff] %v974
        %1039 = vst [vmem:[%s179 + $0x80] sm:$0xff] %v975
        %1040 = vst [vmem:[%s179 + $0x88] sm:$0xff] %v976
        %1041 = vst [vmem:[%s179 + $0x90] sm:$0xff] %v977
        %1042 = vst [vmem:[%s179 + $0x98] sm:$0xff] %v978
        %1043 = vst [vmem:[%s179 + $0xa0] sm:$0xff] %v979
        %1044 = vst [vmem:[%s179 + $0xa8] sm:$0xff] %v980
        %1045 = vst [vmem:[%s179 + $0xb0] sm:$0xff] %v981
        %1046 = vst [vmem:[%s179 + $0xb8] sm:$0xff] %v982
        %1047 = vst [vmem:[%s179 + $0xc0] sm:$0xff] %v983
        %1048 = vst [vmem:[%s179 + $0xc8] sm:$0xff] %v984
        %1049 = vst [vmem:[%s179 + $0xd0] sm:$0xff] %v985
        %1050 = vst [vmem:[%s179 + $0xd8] sm:$0xff] %v986
        %1051 = vst [vmem:[%s179 + $0xe0] sm:$0xff] %v987
        %1052 = vst [vmem:[%s179 + $0xe8] sm:$0xff] %v988
        %1053 = vst [vmem:[%s179 + $0xf0] sm:$0xff] %v989
        %1054 = vst [vmem:[%s179 + $0xf8] sm:$0xff] %v990
        %1055 = vst [vmem:[%s179 + $0x100] sm:$0xff] %v991
        %1056 = vst [vmem:[%s179 + $0x108] sm:$0xff] %v992
        %1057 = vst [vmem:[%s179 + $0x110] sm:$0xff] %v993
        %1058 = vst [vmem:[%s179 + $0x118] sm:$0xff] %v994
        %1059 = vst [vmem:[%s179 + $0x120] sm:$0xff] %v995
        %1060 = vst [vmem:[%s179 + $0x128] sm:$0xff] %v996
        %1061 = vst [vmem:[%s179 + $0x130] sm:$0xff] %v997
        %1062 = vst [vmem:[%s179 + $0x138] sm:$0xff] %v998
        %1063 = vst [vmem:[%s179 + $0x140] sm:$0xff] %v999
        %1064 = vst [vmem:[%s179 + $0x148] sm:$0xff] %v1000
        %1065 = vst [vmem:[%s179 + $0x150] sm:$0xff] %v1001
        %1066 = vst [vmem:[%s179 + $0x158] sm:$0xff] %v1002
        %1067 = vst [vmem:[%s179 + $0x160] sm:$0xff] %v1003
        %1068 = vst [vmem:[%s179 + $0x168] sm:$0xff] %v1004
        %1069 = vst [vmem:[%s179 + $0x170] sm:$0xff] %v1005
        %1070 = vst [vmem:[%s179 + $0x178] sm:$0xff] %v1006
        %1071 = vst [vmem:[%s179 + $0x180] sm:$0xff] %v1007
        %1072 = vst [vmem:[%s179 + $0x188] sm:$0xff] %v1008
        %1073 = vst [vmem:[%s179 + $0x190] sm:$0xff] %v1009
        %1074 = vst [vmem:[%s179 + $0x198] sm:$0xff] %v1010
        %1075 = vst [vmem:[%s179 + $0x1a0] sm:$0xff] %v1011
        %1076 = vst [vmem:[%s179 + $0x1a8] sm:$0xff] %v1012
        %1077 = vst [vmem:[%s179 + $0x1b0] sm:$0xff] %v1013
        %1078 = vst [vmem:[%s179 + $0x1b8] sm:$0xff] %v1014
        %1079 = vst [vmem:[%s179 + $0x1c0] sm:$0xff] %v1015
        %1080 = vst [vmem:[%s179 + $0x1c8] sm:$0xff] %v1016
        %1081 = vst [vmem:[%s179 + $0x1d0] sm:$0xff] %v1017
        %1082 = vst [vmem:[%s179 + $0x1d8] sm:$0xff] %v1018
        %1083 = vst [vmem:[%s179 + $0x1e0] sm:$0xff] %v1019
        %1084 = vst [vmem:[%s179 + $0x1e8] sm:$0xff] %v1020
        %1085 = vst [vmem:[%s179 + $0x1f0] sm:$0xff] %v1021
        %1086 = vst [vmem:[%s179 + $0x1f8] sm:$0xff] %v1022
        %1087 = vst [vmem:[%s179 + $0x200] sm:$0xff] %v198
        %1088 = vst [vmem:[%s179 + $0x208] sm:$0xff] %v199
        %1089 = vst [vmem:[%s179 + $0x210] sm:$0xff] %v200
        %1090 = vst [vmem:[%s179 + $0x218] sm:$0xff] %v201
        %1091 = vst [vmem:[%s179 + $0x220] sm:$0xff] %v202
        %1092 = vst [vmem:[%s179 + $0x228] sm:$0xff] %v203
        %1093 = vst [vmem:[%s179 + $0x230] sm:$0xff] %v204
        %1094 = vst [vmem:[%s179 + $0x238] sm:$0xff] %v205
        %1095 = vst [vmem:[%s179 + $0x240] sm:$0xff] %v206
        %1096 = vst [vmem:[%s179 + $0x248] sm:$0xff] %v207
        %1097 = vst [vmem:[%s179 + $0x250] sm:$0xff] %v208
        %1098 = vst [vmem:[%s179 + $0x258] sm:$0xff] %v209
        %1099 = vst [vmem:[%s179 + $0x260] sm:$0xff] %v210
        %1100 = vst [vmem:[%s179 + $0x268] sm:$0xff] %v211
        %1101 = vst [vmem:[%s179 + $0x270] sm:$0xff] %v212
        %1102 = vst [vmem:[%s179 + $0x278] sm:$0xff] %v213
        %1103 = vst [vmem:[%s179 + $0x280] sm:$0xff] %v214
        %1104 = vst [vmem:[%s179 + $0x288] sm:$0xff] %v215
        %1105 = vst [vmem:[%s179 + $0x290] sm:$0xff] %v216
        %1106 = vst [vmem:[%s179 + $0x298] sm:$0xff] %v217
        %1107 = vst [vmem:[%s179 + $0x2a0] sm:$0xff] %v218
        %1108 = vst [vmem:[%s179 + $0x2a8] sm:$0xff] %v219
        %1109 = vst [vmem:[%s179 + $0x2b0] sm:$0xff] %v220
        %1110 = vst [vmem:[%s179 + $0x2b8] sm:$0xff] %v221
        %1111 = vst [vmem:[%s179 + $0x2c0] sm:$0xff] %v222
        %1112 = vst [vmem:[%s179 + $0x2c8] sm:$0xff] %v223
        %1113 = vst [vmem:[%s179 + $0x2d0] sm:$0xff] %v224
        %1114 = vst [vmem:[%s179 + $0x2d8] sm:$0xff] %v225
        %1115 = vst [vmem:[%s179 + $0x2e0] sm:$0xff] %v226
        %1116 = vst [vmem:[%s179 + $0x2e8] sm:$0xff] %v227
        %1117 = vst [vmem:[%s179 + $0x2f0] sm:$0xff] %v228
        %1118 = vst [vmem:[%s179 + $0x2f8] sm:$0xff] %v229
        %s1119 = sand.u32 %s90, 1
        %s1120 = scalar_lea.sflag [#allocation4], %s1119
        %s1121 = sand.u32 %s90, 1
        %s1122 = smul.addr %s1121, 768
        %s1123 = scalar_lea.vmem [#allocation5], %s1122
        // Predicated region
        $region33: #{tpu_custom_call.1} parent=27 // pred_check
          %p1124 = pneg %p100
        $region34: #{tpu_custom_call.1} parent=27 // pred_check_branch
          %1126 = sbr.rel (%p1124) target = $region36
        $region35: #{tpu_custom_call.1} parent=27 // pred_region
          %s1127 = smul.u32 16, %s24
          %s1129 = ssub.s32 12288, 12288
          %1130 = vsyncadd %s1120, %s1129
          %s1131 = smul.addr %s23, 96
          %s1132 = sadd.s32 %s1127, %s1131
          %s1133 = smul.addr %s1132, 128
          %s1134 = scalar_lea.hbm %s2, %s1133
          %s1135 = sshll.u32 %s1123, 4
          %s1136 = int_to_ptr.vmem [resolvable:$true] %s1135
          %1141 = dma.vmem_to_hbm [thread:$0]  %s1136, 12288, %s1134, %s1120, 2048, 2048, 128
        $region36: #{tpu_custom_call.1} parent=27 // pred_fallthru
          _
      $region28: #{tpu_custom_call.1} parent=5 // pred_fallthru
        _
      %p1142 = scmp.le.s32.totalorder 2, %s14
      // Predicated region
      $region37: #{tpu_custom_call.1} parent=5 // pred_check
        %p1143 = pneg %p1142
      $region38: #{tpu_custom_call.1} parent=5 // pred_check_branch
        %1145 = sbr.rel (%p1143) target = $region40
      $region39: #{tpu_custom_call.1} parent=5 // pred_region
        %s1146 = ssub.s32 %s14, 2
        // Predicated region
        $region41: #{tpu_custom_call.1} parent=39 // pred_check
          %p1147 = pneg %p106
        $region42: #{tpu_custom_call.1} parent=39 // pred_check_branch
          %1149 = sbr.rel (%p1147) target = $region44
        $region43: #{tpu_custom_call.1} parent=39 // pred_region
          %s1150 = sand.u32 %s91, 1
          %s1151 = scalar_lea.sflag [#allocation4], %s1150
          %s1152 = sand.u32 %s91, 1
          %s1153 = smul.addr %s1152, 768
          %s1154 = scalar_lea.vmem [#allocation5], %s1153
          %1155 = dma.done %s1151, 12288
        $region44: #{tpu_custom_call.1} parent=39 // pred_fallthru
          _
      $region40: #{tpu_custom_call.1} parent=5 // pred_fallthru
        _
    $region6: #{tpu_custom_call.1} parent=1 // loop_footer
      %s18 = sadd.s32 1, %s14
    $region7: #{tpu_custom_call.1} parent=1 // loop_footer_branch
      %13 = sbr.rel target = $region3
    $region8: #{tpu_custom_call.1} parent=1 // loop_exit
      _
    %1156 = vsyncpa [#allocation3], 1
    %s1157 = scalar_lea.sflag [#allocation3], 1
    %1158 = vsyncpa %s1157, 1
    %1159 = vsyncpa [#allocation4], 1
    %s1160 = scalar_lea.sflag [#allocation4], 1
    %1161 = vsyncpa %s1160, 1

</llo_original>
